<compile_context>
chip_gen: v6e
topology: v6e:2x2x1
jax: 0.10.0
libtpu: 0.0.40
codegen_flags: <defaults>
</compile_context>

<pallas_src>
import functools

import jax
import jax.numpy as jnp
from jax.experimental import pallas as pl
from jax.experimental.pallas import tpu as pltpu


def _token_compression_kernel(x_ref, w1_ref, b1_ref, w2_ref, b2_ref, o_ref):
    # x_ref : (tile_r, P*bs*H)   P token-blocks packed per lane-dense row
    # w1_ref: (P*bs*H, P*H)      block-diag stacked W1 (pos + mean folded in)
    # w2_ref: (P*H,   P*H)       block-diag W2
    # b1_ref/b2_ref: (1, P*H)    f32
    w1 = w1_ref[...]
    w2 = w2_ref[...]
    x = x_ref[...].astype(w1.dtype)                       # no-op on f32 path
    h = jnp.dot(x, w1, preferred_element_type=jnp.float32) + b1_ref[...]
    h = jax.nn.sigmoid(h)                                  # EUP transcendental
    out = jnp.dot(h.astype(w2.dtype), w2,
                  preferred_element_type=jnp.float32) + b2_ref[...]
    o_ref[...] = out.astype(o_ref.dtype)


def _round_up(a, m):
    return ((a + m - 1) // m) * m


def _packing_factor(hidden_size):
    # Pack P token-blocks per 128-lane output row when H divides 128.
    # (If it doesn't, P=1 and the output falls back to masked partial stores.)
    if hidden_size < 128 and 128 % hidden_size == 0:
        return 128 // hidden_size
    return 1


def _prepare_weights(pos_enc, w1, b1, w2, b2, *, block_size, pack,
                     matmul_dtype=jnp.float32):
    """Fold pos-add + mean-over-bs into matmul-1 and build block-diag weights.

    Pure function of the parameters: hoist / cache it once per weight set, or
    run it inside the same jit as the kernel call so XLA fuses it away.
    """
    bs = block_size
    hidden = w1.shape[0]
    # PyTorch Linear: y = x @ W.T + b
    w1t = w1.T.astype(jnp.float32)                         # (H, H)
    w2t = w2.T.astype(jnp.float32)                         # (H, H)
    # mean_{k<bs}(x_k + pos_k) @ W1^T + b1
    #   == x_flat @ (tile(W1^T, bs)/bs) + (mean(pos) @ W1^T + b1)
    w1_stack = jnp.tile(w1t, (bs, 1)) / bs                 # (bs*H, H)
    b1f = b1.astype(jnp.float32) + pos_enc.astype(jnp.float32).mean(0) @ w1t
    eye_p = jnp.eye(pack, dtype=jnp.float32)
    w1_big = jnp.kron(eye_p, w1_stack).astype(matmul_dtype)    # (P*bs*H, P*H)
    w2_big = jnp.kron(eye_p, w2t).astype(matmul_dtype)         # (P*H,   P*H)
    b1_big = jnp.tile(b1f, pack).reshape(1, pack * hidden)
    b2_big = jnp.tile(b2.astype(jnp.float32), pack).reshape(1, pack * hidden)
    return w1_big, b1_big, w2_big, b2_big


def token_compression(x, pos_enc, w1, b1, w2, b2, *, block_size,
                      tile_rows=None, matmul_dtype=jnp.float32,
                      vmem_budget_bytes=32 * 1024 * 1024):
    """x: (B, T, H); returns (B, T // block_size, H)."""
    B, T, H = x.shape
    bs = block_size
    assert T % bs == 0
    n_blocks = T // bs
    N = B * n_blocks

    P = _packing_factor(H)
    k_in = P * bs * H                                      # matmul-1 K width
    k_out = P * H                                          # output lanes

    w1_big, b1_big, w2_big, b2_big = _prepare_weights(
        pos_enc, w1, b1, w2, b2, block_size=bs, pack=P, matmul_dtype=matmul_dtype)
    # TODO(synk): for very large bs*H (weights >> VMEM) matmul-1's K dimension
    # needs its own "arbitrary" grid axis; and for bs >~ 8 in a compute-bound
    # regime, reduce over bs in-kernel instead of widening K by bs.

    # ---- row packing / tiny tail padding ----------------------------------
    # Sublane quantum of the streamed dtype: f32 -> 8, bf16 -> 16, int8 -> 32.
    sub = max(8, 32 // max(1, x.dtype.itemsize))
    R = pl.cdiv(N, P)                                      # packed rows needed
    r_pad = _round_up(R, sub)                              # <= sub-1 extra rows
    n_pad = r_pad * P

    x_flat = x.reshape(N, bs * H)
    if n_pad != N:
        # <= sub*P - 1 token-blocks of zeros; allow_input_fusion lets XLA fold
        # this (and the reshape) into the pallas_call's input DMA.
        x_flat = jnp.pad(x_flat, ((0, n_pad - N), (0, 0)))
    x_big = x_flat.reshape(r_pad, k_in)                    # row-major repack

    # ---- tile sizing from the VMEM budget ---------------------------------
    # Note: the weight index maps are constant so they are DMA'd only once;
    # for huge bs*H add pipeline_mode=pl.Buffered(1) on them to halve their
    # (negligible here) double-buffered footprint.
    w_bytes = 2 * (w1_big.size * w1_big.dtype.itemsize
                   + w2_big.size * w2_big.dtype.itemsize
                   + (b1_big.size + b2_big.size) * 4)      # double-buffered
    row_bytes = 2 * (k_in + k_out) * x.dtype.itemsize      # dbl-buffered in+out
    usable = max(sub * row_bytes, (vmem_budget_bytes * 3) // 4 - w_bytes)
    cap = max(sub, (usable // row_bytes) // sub * sub)
    if tile_rows is None:
        tile_r = cap
    else:
        tile_r = max(sub, (min(tile_rows, cap) // sub) * sub)
    tile_r = min(tile_r, r_pad)
    grid = (pl.cdiv(r_pad, tile_r),)

    out_big = pl.pallas_call(
        _token_compression_kernel,
        out_shape=jax.ShapeDtypeStruct((r_pad, k_out), x.dtype),
        grid_spec=pltpu.PrefetchScalarGridSpec(
            num_scalar_prefetch=0,
            grid=grid,
            in_specs=[
                pl.BlockSpec((tile_r, k_in), lambda i: (i, 0)),
                pl.BlockSpec((k_in, k_out), lambda i: (0, 0)),
                pl.BlockSpec((1, k_out), lambda i: (0, 0)),
                pl.BlockSpec((k_out, k_out), lambda i: (0, 0)),
                pl.BlockSpec((1, k_out), lambda i: (0, 0)),
            ],
            out_specs=pl.BlockSpec((tile_r, k_out), lambda i: (i, 0)),
        ),
        compiler_params=pltpu.CompilerParams(
            dimension_semantics=("parallel",),
            vmem_limit_bytes=int(vmem_budget_bytes),
            allow_input_fusion=[True, False, False, False, False],
        ),
    )(x_big, w1_big, b1_big, w2_big, b2_big)

    out_flat = out_big.reshape(n_pad, H)[:N]               # trim <= sub*P-1 rows
    return out_flat.reshape(B, n_blocks, H)


def _reference(x, pos_enc, w1, b1, w2, b2, *, block_size):
    B, T, H = x.shape
    xb = x.reshape(B, T // block_size, block_size, H) + pos_enc[None, None]
    m = xb.mean(axis=-2)
    h = jax.nn.sigmoid(m @ w1.T + b1)
    return h @ w2.T + b2


if __name__ == "__main__":
    # Small shapes consistent with the module's forward.
    B, T, H = 2, 16, 32
    block_size = 4
    num_heads = 4  # unused in forward (matches the PyTorch module)

    key = jax.random.PRNGKey(0)
    kx, kp, kw1, kb1, kw2, kb2 = jax.random.split(key, 6)

    x = jax.random.normal(kx, (B, T, H), dtype=jnp.float32)
    pos_enc = jax.random.normal(kp, (block_size, H), dtype=jnp.float32)
    # Deterministic "nn.Linear"-style parameters
    w1 = jax.random.normal(kw1, (H, H), dtype=jnp.float32) * 0.1
    b1 = jax.random.normal(kb1, (H,), dtype=jnp.float32) * 0.1
    w2 = jax.random.normal(kw2, (H, H), dtype=jnp.float32) * 0.1
    b2 = jax.random.normal(kb2, (H,), dtype=jnp.float32) * 0.1

    # Whole wrapper under one jit: weight prep / pad / reshape / trim fuse into
    # a single XLA program (for repeated calls, hoist _prepare_weights too).
    fn = jax.jit(functools.partial(token_compression, block_size=block_size))
    out = jax.block_until_ready(fn(x, pos_enc, w1, b1, w2, b2))

    ref = _reference(x, pos_enc, w1, b1, w2, b2, block_size=block_size)
    assert out.shape == (B, T // block_size, H)
    # Folding pos-add/mean into matmul-1 reassociates f32 sums; tolerance kept
    # tight.  (With matmul_dtype=jnp.bfloat16, relax to ~1e-2.)
    assert jnp.allclose(out, ref, atol=1e-4, rtol=1e-4)

    print("KERNEL_OK")
</pallas_src>

<mosaic_0001>
module attributes {stable_mosaic.version = 11 : i64} {
  func.func @_token_compression_kernel(%arg0: i32, %arg1: memref<8x512xf32, #tpu.memory_space<vmem>>, %arg2: memref<512x128xf32, #tpu.memory_space<vmem>>, %arg3: memref<1x128xf32, #tpu.memory_space<vmem>>, %arg4: memref<128x128xf32, #tpu.memory_space<vmem>>, %arg5: memref<1x128xf32, #tpu.memory_space<vmem>>, %arg6: memref<8x128xf32, #tpu.memory_space<vmem>>) attributes {dimension_semantics = [#tpu.dimension_semantics<parallel>], iteration_bounds = array<i64: 1>, scalar_prefetch = 0 : i64, scratch_operands = 0 : i64, tpu.core_type = #tpu.core_type<tc>, window_params = [{transform_indices = @transform_0, window_bounds = array<i64: 8, 512>}, {pipeline_mode = #tpu.pipeline_mode<synchronous>, transform_indices = @transform_1, window_bounds = array<i64: 512, 128>}, {pipeline_mode = #tpu.pipeline_mode<synchronous>, transform_indices = @transform_2, window_bounds = array<i64: 1, 128>}, {pipeline_mode = #tpu.pipeline_mode<synchronous>, transform_indices = @transform_3, window_bounds = array<i64: 128, 128>}, {pipeline_mode = #tpu.pipeline_mode<synchronous>, transform_indices = @transform_4, window_bounds = array<i64: 1, 128>}, {transform_indices = @transform_5, window_bounds = array<i64: 8, 128>}]} {
    %c0 = arith.constant 0 : index
    %c0_0 = arith.constant 0 : index
    %0 = vector.load %arg2[%c0, %c0_0] : memref<512x128xf32, #tpu.memory_space<vmem>>, vector<512x128xf32>
    %c0_1 = arith.constant 0 : index
    %c0_2 = arith.constant 0 : index
    %1 = vector.load %arg4[%c0_1, %c0_2] : memref<128x128xf32, #tpu.memory_space<vmem>>, vector<128x128xf32>
    %c0_3 = arith.constant 0 : index
    %c0_4 = arith.constant 0 : index
    %2 = vector.load %arg1[%c0_3, %c0_4] : memref<8x512xf32, #tpu.memory_space<vmem>>, vector<8x512xf32>
    %cst = arith.constant dense<0.000000e+00> : vector<8x128xf32>
    %3 = tpu.matmul %2, %0, %cst {dimension_numbers = #tpu.dot_dimension_numbers<[1], [0], [0], [1], [0, 0, 1, 1], [], []>} : vector<8x512xf32>, vector<512x128xf32>, vector<8x128xf32> -> vector<8x128xf32>
    %c0_5 = arith.constant 0 : index
    %c0_6 = arith.constant 0 : index
    %4 = vector.load %arg3[%c0_5, %c0_6] : memref<1x128xf32, #tpu.memory_space<vmem>>, vector<1x128xf32>
    %5 = vector.broadcast %4 : vector<1x128xf32> to vector<8x128xf32>
    %6 = arith.addf %3, %5 : vector<8x128xf32>
    %7 = arith.negf %6 : vector<8x128xf32>
    %8 = math.exp %7 : vector<8x128xf32>
    %cst_7 = arith.constant 1.000000e+00 : f32
    %9 = vector.broadcast %cst_7 : f32 to vector<8x128xf32>
    %10 = arith.addf %9, %8 : vector<8x128xf32>
    %11 = arith.divf %9, %10 : vector<8x128xf32>
    %cst_8 = arith.constant dense<0.000000e+00> : vector<8x128xf32>
    %12 = tpu.matmul %11, %1, %cst_8 {dimension_numbers = #tpu.dot_dimension_numbers<[1], [0], [0], [1], [0, 0, 1, 1], [], []>} : vector<8x128xf32>, vector<128x128xf32>, vector<8x128xf32> -> vector<8x128xf32>
    %c0_9 = arith.constant 0 : index
    %c0_10 = arith.constant 0 : index
    %13 = vector.load %arg5[%c0_9, %c0_10] : memref<1x128xf32, #tpu.memory_space<vmem>>, vector<1x128xf32>
    %14 = vector.broadcast %13 : vector<1x128xf32> to vector<8x128xf32>
    %15 = arith.addf %12, %14 : vector<8x128xf32>
    %c0_11 = arith.constant 0 : index
    %c0_12 = arith.constant 0 : index
    %16 = vector.load %arg6[%c0_11, %c0_12] : memref<8x128xf32, #tpu.memory_space<vmem>>, vector<8x128xf32>
    tpu.vector_store %arg6[%c0_11, %c0_12], %15 {strides = array<i32>} : memref<8x128xf32, #tpu.memory_space<vmem>>, vector<8x128xf32>,
    return
  }
  func.func @transform_0(%arg0: i32) -> (i32, i32) {
    %c0_i32 = arith.constant 0 : i32
    %c0_i32_0 = arith.constant 0 : i32
    return %arg0, %c0_i32 : i32, i32
  }
  func.func @transform_1(%arg0: i32) -> (i32, i32) {
    %c0_i32 = arith.constant 0 : i32
    %c0_i32_0 = arith.constant 0 : i32
    %c0_i32_1 = arith.constant 0 : i32
    return %c0_i32, %c0_i32_0 : i32, i32
  }
  func.func @transform_2(%arg0: i32) -> (i32, i32) {
    %c0_i32 = arith.constant 0 : i32
    %c0_i32_0 = arith.constant 0 : i32
    %c0_i32_1 = arith.constant 0 : i32
    return %c0_i32, %c0_i32_0 : i32, i32
  }
  func.func @transform_3(%arg0: i32) -> (i32, i32) {
    %c0_i32 = arith.constant 0 : i32
    %c0_i32_0 = arith.constant 0 : i32
    %c0_i32_1 = arith.constant 0 : i32
    return %c0_i32, %c0_i32_0 : i32, i32
  }
  func.func @transform_4(%arg0: i32) -> (i32, i32) {
    %c0_i32 = arith.constant 0 : i32
    %c0_i32_0 = arith.constant 0 : i32
    %c0_i32_1 = arith.constant 0 : i32
    return %c0_i32, %c0_i32_0 : i32, i32
  }
  func.func @transform_5(%arg0: i32) -> (i32, i32) {
    %c0_i32 = arith.constant 0 : i32
    %c0_i32_0 = arith.constant 0 : i32
    return %arg0, %c0_i32 : i32, i32
  }
}

</mosaic_0001>

<llo_original>
// kernel: tile.23
$region0: #{tile.23}
  #allocation0 [shape = 's32[1]{0}', space=sflag, size = 0x4, scoped, tag = 'scoped memory for tile.23']
  %s0 = inlined_call_operand.vmem [shape: f32[32], index: 0, kind: input, shape index: {}]
  %s1 = inlined_call_operand.vmem [shape: f32[4,32], index: 1, kind: output, shape index: {}]
  // Predicated region
  $region2: #{tile.23} parent=0 // pred_check
    _
  $region3: #{tile.23} parent=0 // pred_check_branch
    %3 = sbr.rel (0) target = $region5
  $region4: #{tile.23} parent=0 // pred_region
    _
  $region5: #{tile.23} parent=0 // pred_fallthru
    _
  %v4 = vld [vmem:[%s0] ss:$0 sm:$0xff]
  %5 = vst [vmem:[%s1] sm:$0xf] %v4

// kernel: tile.24
$region0: #{tile.24}
  %s0 = inlined_call_operand.vmem [shape: f32[4,32], index: 0, kind: input, shape index: {}]
  %s1 = inlined_call_operand.vmem [shape: f32[1,128], index: 1, kind: output, shape index: {}]
  $region1: #{tile.24} parent=0
    #allocation0 [shape = 'u8[4096]{0}', space=vmem, size = 0x1000, scoped, tag = 'scoped mem for output reshape']
    #allocation1 [shape = 'u8[4096]{0}', space=vmem, size = 0x1000, scoped, tag = 'scoped mem for input reshape']
    %s3 = sshll.u32 1, 4
    %s4 = ssub.s32 %s3, 1
    %v5 = vld [vmem:[%s0] sm:%s4]
    %6 = vst [vmem:[#allocation1] sm:%s4] %v5
    %v7 = vld [vmem:[#allocation1] sm:$0x1]
    %vm8 = vcmask 261120
    %9 = vst.msk [vmem:[#allocation0] sm:$0x1] %vm8, %v7
    %s10 = scalar_lea.vmem [#allocation1], 3
    %v11 = vld [vmem:[%s10] sm:$0x1]
    %12 = vrot.lane.b32.xlu0 %v11, 96
    %v13 = vpop.permute.xlu0 %12
    %vm14 = vcmask 1048320
    %15 = vst.msk [vmem:[#allocation0] sm:$0x1] %vm14, %v13
    %s16 = scalar_lea.vmem [#allocation1], 2
    %v17 = vld [vmem:[%s16] sm:$0x1]
    %18 = vrot.lane.b32.xlu0 %v17, 64
    %v19 = vpop.permute.xlu0 %18
    %vm20 = vcmask 785920
    %21 = vst.msk [vmem:[#allocation0] sm:$0x1] %vm20, %v19
    %s22 = scalar_lea.vmem [#allocation1], 1
    %v23 = vld [vmem:[%s22] sm:$0x1]
    %24 = vrot.lane.b32.xlu0 %v23, 32
    %v25 = vpop.permute.xlu0 %24
    %vm26 = vcmask 523520
    %27 = vst.msk [vmem:[#allocation0] sm:$0x1] %vm26, %v25
    %s29 = sshll.u32 1, 1
    %s30 = ssub.s32 %s29, 1
    %v32 = vld [vmem:[#allocation0] sm:%s30]
    %s33 = sshll.u32 1, 1
    %s34 = ssub.s32 %s33, 1
    %35 = vst [vmem:[%s1] sm:%s34] %v32

// kernel: token_compression.1
$region0: #{token_compression.1}
  #allocation0 [shape = 'u32[]', space=smem, size = 0x4, offset = 0x4, fixed_abs, tag = 'smem constant byte address 0x4 - core index']
  #allocation1 [shape = 'u32[144,128]{1,0:T(1,128)}', space=vmem, size = 0x12000, scoped, tag = 'internal scratch']
  %s0 = inlined_call_operand.vmem [shape: f32[8,512], index: 0, kind: input, shape index: {}]
  %s1 = inlined_call_operand.vmem [shape: f32[512,128], index: 1, kind: input, shape index: {}]
  %s2 = inlined_call_operand.vmem [shape: f32[1,128], index: 2, kind: input, shape index: {}]
  %s3 = inlined_call_operand.vmem [shape: f32[128,128], index: 3, kind: input, shape index: {}]
  %s4 = inlined_call_operand.vmem [shape: f32[1,128], index: 4, kind: input, shape index: {}]
  %s5 = inlined_call_operand.vmem [shape: f32[8,128], index: 5, kind: output, shape index: {}]
  %s6 = sld [smem:[#allocation0]]
  $region30: #{token_compression.1} parent=0
    _
  %s8 = ssub.s32 1, %s6
  %s9 = scalar_select 0, %s8, %s6
  // Predicated region
  $region2: #{token_compression.1} parent=0 // pred_check
    _
  $region3: #{token_compression.1} parent=0 // pred_check_branch
    %11 = sbr.rel (0) target = $region5
  $region4: #{token_compression.1} parent=0 // pred_region
    _
  $region5: #{token_compression.1} parent=0 // pred_fallthru
    _
  // Predicated region
  $region6: #{token_compression.1} parent=0 // pred_check
    _
  $region7: #{token_compression.1} parent=0 // pred_check_branch
    %13 = sbr.rel (0) target = $region9
  $region8: #{token_compression.1} parent=0 // pred_region
    _
  $region9: #{token_compression.1} parent=0 // pred_fallthru
    _
  // Predicated region
  $region10: #{token_compression.1} parent=0 // pred_check
    _
  $region11: #{token_compression.1} parent=0 // pred_check_branch
    %15 = sbr.rel (0) target = $region13
  $region12: #{token_compression.1} parent=0 // pred_region
    _
  $region13: #{token_compression.1} parent=0 // pred_fallthru
    _
  // Predicated region
  $region14: #{token_compression.1} parent=0 // pred_check
    _
  $region15: #{token_compression.1} parent=0 // pred_check_branch
    %17 = sbr.rel (0) target = $region17
  $region16: #{token_compression.1} parent=0 // pred_region
    _
  $region17: #{token_compression.1} parent=0 // pred_fallthru
    _
  // Predicated region
  $region18: #{token_compression.1} parent=0 // pred_check
    _
  $region19: #{token_compression.1} parent=0 // pred_check_branch
    %19 = sbr.rel (0) target = $region21
  $region20: #{token_compression.1} parent=0 // pred_region
    _
  $region21: #{token_compression.1} parent=0 // pred_fallthru
    _
  %v20 = vld [vmem:[%s1] sm:$0xff]
  %v21 = vld [vmem:[%s1 + $0x8] sm:$0xff]
  %v22 = vld [vmem:[%s1 + $0x10] sm:$0xff]
  %v23 = vld [vmem:[%s1 + $0x18] sm:$0xff]
  %v24 = vld [vmem:[%s1 + $0x20] sm:$0xff]
  %v25 = vld [vmem:[%s1 + $0x28] sm:$0xff]
  %v26 = vld [vmem:[%s1 + $0x30] sm:$0xff]
  %v27 = vld [vmem:[%s1 + $0x38] sm:$0xff]
  %v28 = vld [vmem:[%s1 + $0x40] sm:$0xff]
  %v29 = vld [vmem:[%s1 + $0x48] sm:$0xff]
  %v30 = vld [vmem:[%s1 + $0x50] sm:$0xff]
  %v31 = vld [vmem:[%s1 + $0x58] sm:$0xff]
  %v32 = vld [vmem:[%s1 + $0x60] sm:$0xff]
  %v33 = vld [vmem:[%s1 + $0x68] sm:$0xff]
  %v34 = vld [vmem:[%s1 + $0x70] sm:$0xff]
  %v35 = vld [vmem:[%s1 + $0x78] sm:$0xff]
  %v36 = vld [vmem:[%s1 + $0x80] sm:$0xff]
  %v37 = vld [vmem:[%s1 + $0x88] sm:$0xff]
  %v38 = vld [vmem:[%s1 + $0x90] sm:$0xff]
  %v39 = vld [vmem:[%s1 + $0x98] sm:$0xff]
  %v40 = vld [vmem:[%s1 + $0xa0] sm:$0xff]
  %v41 = vld [vmem:[%s1 + $0xa8] sm:$0xff]
  %v42 = vld [vmem:[%s1 + $0xb0] sm:$0xff]
  %v43 = vld [vmem:[%s1 + $0xb8] sm:$0xff]
  %v44 = vld [vmem:[%s1 + $0xc0] sm:$0xff]
  %v45 = vld [vmem:[%s1 + $0xc8] sm:$0xff]
  %v46 = vld [vmem:[%s1 + $0xd0] sm:$0xff]
  %v47 = vld [vmem:[%s1 + $0xd8] sm:$0xff]
  %v48 = vld [vmem:[%s1 + $0xe0] sm:$0xff]
  %v49 = vld [vmem:[%s1 + $0xe8] sm:$0xff]
  %v50 = vld [vmem:[%s1 + $0xf0] sm:$0xff]
  %v51 = vld [vmem:[%s1 + $0xf8] sm:$0xff]
  %v52 = vld [vmem:[%s1 + $0x100] sm:$0xff]
  %v53 = vld [vmem:[%s1 + $0x108] sm:$0xff]
  %v54 = vld [vmem:[%s1 + $0x110] sm:$0xff]
  %v55 = vld [vmem:[%s1 + $0x118] sm:$0xff]
  %v56 = vld [vmem:[%s1 + $0x120] sm:$0xff]
  %v57 = vld [vmem:[%s1 + $0x128] sm:$0xff]
  %v58 = vld [vmem:[%s1 + $0x130] sm:$0xff]
  %v59 = vld [vmem:[%s1 + $0x138] sm:$0xff]
  %v60 = vld [vmem:[%s1 + $0x140] sm:$0xff]
  %v61 = vld [vmem:[%s1 + $0x148] sm:$0xff]
  %v62 = vld [vmem:[%s1 + $0x150] sm:$0xff]
  %v63 = vld [vmem:[%s1 + $0x158] sm:$0xff]
  %v64 = vld [vmem:[%s1 + $0x160] sm:$0xff]
  %v65 = vld [vmem:[%s1 + $0x168] sm:$0xff]
  %v66 = vld [vmem:[%s1 + $0x170] sm:$0xff]
  %v67 = vld [vmem:[%s1 + $0x178] sm:$0xff]
  %v68 = vld [vmem:[%s1 + $0x180] sm:$0xff]
  %v69 = vld [vmem:[%s1 + $0x188] sm:$0xff]
  %v70 = vld [vmem:[%s1 + $0x190] sm:$0xff]
  %v71 = vld [vmem:[%s1 + $0x198] sm:$0xff]
  %v72 = vld [vmem:[%s1 + $0x1a0] sm:$0xff]
  %v73 = vld [vmem:[%s1 + $0x1a8] sm:$0xff]
  %v74 = vld [vmem:[%s1 + $0x1b0] sm:$0xff]
  %v75 = vld [vmem:[%s1 + $0x1b8] sm:$0xff]
  %v76 = vld [vmem:[%s1 + $0x1c0] sm:$0xff]
  %v77 = vld [vmem:[%s1 + $0x1c8] sm:$0xff]
  %v78 = vld [vmem:[%s1 + $0x1d0] sm:$0xff]
  %v79 = vld [vmem:[%s1 + $0x1d8] sm:$0xff]
  %v80 = vld [vmem:[%s1 + $0x1e0] sm:$0xff]
  %v81 = vld [vmem:[%s1 + $0x1e8] sm:$0xff]
  %v82 = vld [vmem:[%s1 + $0x1f0] sm:$0xff]
  %v83 = vld [vmem:[%s1 + $0x1f8] sm:$0xff]
  %v84 = vld [vmem:[%s3] sm:$0xff]
  %v85 = vld [vmem:[%s3 + $0x8] sm:$0xff]
  %v86 = vld [vmem:[%s3 + $0x10] sm:$0xff]
  %v87 = vld [vmem:[%s3 + $0x18] sm:$0xff]
  %v88 = vld [vmem:[%s3 + $0x20] sm:$0xff]
  %v89 = vld [vmem:[%s3 + $0x28] sm:$0xff]
  %v90 = vld [vmem:[%s3 + $0x30] sm:$0xff]
  %v91 = vld [vmem:[%s3 + $0x38] sm:$0xff]
  %v92 = vld [vmem:[%s3 + $0x40] sm:$0xff]
  %v93 = vld [vmem:[%s3 + $0x48] sm:$0xff]
  %v94 = vld [vmem:[%s3 + $0x50] sm:$0xff]
  %v95 = vld [vmem:[%s3 + $0x58] sm:$0xff]
  %v96 = vld [vmem:[%s3 + $0x60] sm:$0xff]
  %v97 = vld [vmem:[%s3 + $0x68] sm:$0xff]
  %v98 = vld [vmem:[%s3 + $0x70] sm:$0xff]
  %v99 = vld [vmem:[%s3 + $0x78] sm:$0xff]
  %v100 = vld [vmem:[%s0] sm:$0xff]
  %v101 = vld [vmem:[%s0 + $0x8] sm:$0xff]
  %v102 = vld [vmem:[%s0 + $0x10] sm:$0xff]
  %v103 = vld [vmem:[%s0 + $0x18] sm:$0xff]
  %v104 = vld [vmem:[%s2] sm:$0x1]
  %v106 = vlaneseq
  %v107 = vshrl.u32 %v106, 7
  %v108 = vsub.s32 0, %v107
  %v109 = vrot.slane %v104, %v108
  %111 = vmatprep.subr.mxu0 0.0
  %112 = vmatpush1.msra.mxu0 %v35
  %113 = vmatprep.subr.mxu0 0.0
  %114 = vmatpush1.msra.mxu0 %v34
  %115 = vmatprep.subr.mxu0 0.0
  %116 = vmatpush1.msra.mxu0 %v33
  %117 = vmatprep.subr.mxu0 0.0
  %118 = vmatpush1.msra.mxu0 %v32
  %119 = vmatprep.subr.mxu0 0.0
  %120 = vmatpush1.msra.mxu0 %v31
  %121 = vmatprep.subr.mxu0 0.0
  %122 = vmatpush1.msra.mxu0 %v30
  %123 = vmatprep.subr.mxu0 0.0
  %124 = vmatpush1.msra.mxu0 %v29
  %125 = vmatprep.subr.mxu0 0.0
  %126 = vmatpush1.msra.mxu0 %v28
  %127 = vmatprep.subr.mxu0 0.0
  %128 = vmatpush1.msra.mxu0 %v27
  %129 = vmatprep.subr.mxu0 0.0
  %130 = vmatpush1.msra.mxu0 %v26
  %131 = vmatprep.subr.mxu0 0.0
  %132 = vmatpush1.msra.mxu0 %v25
  %133 = vmatprep.subr.mxu0 0.0
  %134 = vmatpush1.msra.mxu0 %v24
  %135 = vmatprep.subr.mxu0 0.0
  %136 = vmatpush1.msra.mxu0 %v23
  %137 = vmatprep.subr.mxu0 0.0
  %138 = vmatpush1.msra.mxu0 %v22
  %139 = vmatprep.subr.mxu0 0.0
  %140 = vmatpush1.msra.mxu0 %v21
  %141 = vmatprep.subr.mxu0 0.0
  %142 = vmatpush1.msra.mxu0 %v20
  %143 = vmatprep.subr.mxu0 0.0
  %144 = vmatpush2.msra.mxu0 %v51
  %145 = vmatprep.subr.mxu0 0.0
  %146 = vmatpush2.msra.mxu0 %v50
  %147 = vmatprep.subr.mxu0 0.0
  %148 = vmatpush2.msra.mxu0 %v49
  %149 = vmatprep.subr.mxu0 0.0
  %150 = vmatpush2.msra.mxu0 %v48
  %151 = vmatprep.subr.mxu0 0.0
  %152 = vmatpush2.msra.mxu0 %v47
  %153 = vmatprep.subr.mxu0 0.0
  %154 = vmatpush2.msra.mxu0 %v46
  %155 = vmatprep.subr.mxu0 0.0
  %156 = vmatpush2.msra.mxu0 %v45
  %157 = vmatprep.subr.mxu0 0.0
  %158 = vmatpush2.msra.mxu0 %v44
  %159 = vmatprep.subr.mxu0 0.0
  %160 = vmatpush2.msra.mxu0 %v43
  %161 = vmatprep.subr.mxu0 0.0
  %162 = vmatpush2.msra.mxu0 %v42
  %163 = vmatprep.subr.mxu0 0.0
  %164 = vmatpush2.msra.mxu0 %v41
  %165 = vmatprep.subr.mxu0 0.0
  %166 = vmatpush2.msra.mxu0 %v40
  %167 = vmatprep.subr.mxu0 0.0
  %168 = vmatpush2.msra.mxu0 %v39
  %169 = vmatprep.subr.mxu0 0.0
  %170 = vmatpush2.msra.mxu0 %v38
  %171 = vmatprep.subr.mxu0 0.0
  %172 = vmatpush2.msra.mxu0 %v37
  %173 = vmatprep.subr.mxu0 0.0
  %174 = vmatpush2.msra.mxu0 %v36
  %175 = vmatprep.mubr.f32.mxu0 %v101
  %176 = vmatmul.mubr.f32.gmra.mxu0 %v100
  %v177 = vpop.f32.mrf.mxu0
  %v178 = vadd.f32 %v109, %v177
  %v179 = vpop.f32.mrf.mxu0
  %180 = vdwg.mxu0
  %181 = vmatprep.subr.mxu0 0.0
  %182 = vmatpush1.msra.mxu0 %v67
  %183 = vmatprep.subr.mxu0 0.0
  %184 = vmatpush1.msra.mxu0 %v66
  %185 = vmatprep.subr.mxu0 0.0
  %186 = vmatpush1.msra.mxu0 %v65
  %187 = vmatprep.subr.mxu0 0.0
  %188 = vmatpush1.msra.mxu0 %v64
  %189 = vmatprep.subr.mxu0 0.0
  %190 = vmatpush1.msra.mxu0 %v63
  %191 = vmatprep.subr.mxu0 0.0
  %192 = vmatpush1.msra.mxu0 %v62
  %193 = vmatprep.subr.mxu0 0.0
  %194 = vmatpush1.msra.mxu0 %v61
  %195 = vmatprep.subr.mxu0 0.0
  %196 = vmatpush1.msra.mxu0 %v60
  %197 = vmatprep.subr.mxu0 0.0
  %198 = vmatpush1.msra.mxu0 %v59
  %199 = vmatprep.subr.mxu0 0.0
  %200 = vmatpush1.msra.mxu0 %v58
  %201 = vmatprep.subr.mxu0 0.0
  %202 = vmatpush1.msra.mxu0 %v57
  %203 = vmatprep.subr.mxu0 0.0
  %204 = vmatpush1.msra.mxu0 %v56
  %205 = vmatprep.subr.mxu0 0.0
  %206 = vmatpush1.msra.mxu0 %v55
  %207 = vmatprep.subr.mxu0 0.0
  %208 = vmatpush1.msra.mxu0 %v54
  %209 = vmatprep.subr.mxu0 0.0
  %210 = vmatpush1.msra.mxu0 %v53
  %211 = vmatprep.subr.mxu0 0.0
  %212 = vmatpush1.msra.mxu0 %v52
  %213 = vmatprep.subr.mxu0 0.0
  %214 = vmatpush2.msra.mxu0 %v83
  %215 = vmatprep.subr.mxu0 0.0
  %216 = vmatpush2.msra.mxu0 %v82
  %217 = vmatprep.subr.mxu0 0.0
  %218 = vmatpush2.msra.mxu0 %v81
  %219 = vmatprep.subr.mxu0 0.0
  %220 = vmatpush2.msra.mxu0 %v80
  %221 = vmatprep.subr.mxu0 0.0
  %222 = vmatpush2.msra.mxu0 %v79
  %223 = vmatprep.subr.mxu0 0.0
  %224 = vmatpush2.msra.mxu0 %v78
  %225 = vmatprep.subr.mxu0 0.0
  %226 = vmatpush2.msra.mxu0 %v77
  %227 = vmatprep.subr.mxu0 0.0
  %228 = vmatpush2.msra.mxu0 %v76
  %229 = vmatprep.subr.mxu0 0.0
  %230 = vmatpush2.msra.mxu0 %v75
  %231 = vmatprep.subr.mxu0 0.0
  %232 = vmatpush2.msra.mxu0 %v74
  %233 = vmatprep.subr.mxu0 0.0
  %234 = vmatpush2.msra.mxu0 %v73
  %235 = vmatprep.subr.mxu0 0.0
  %236 = vmatpush2.msra.mxu0 %v72
  %237 = vmatprep.subr.mxu0 0.0
  %238 = vmatpush2.msra.mxu0 %v71
  %239 = vmatprep.subr.mxu0 0.0
  %240 = vmatpush2.msra.mxu0 %v70
  %241 = vmatprep.subr.mxu0 0.0
  %242 = vmatpush2.msra.mxu0 %v69
  %243 = vmatprep.subr.mxu0 0.0
  %244 = vmatpush2.msra.mxu0 %v68
  %245 = vmatprep.mubr.f32.mxu0 %v103
  %246 = vmatmul.mubr.f32.gmra.mxu0 %v102
  %v247 = vpop.f32.mrf.mxu0
  %v248 = vadd.f32 %v178, %v247
  %v249 = vpop.f32.mrf.mxu0
  %250 = vdwg.mxu0
  %v251 = vxor.u32 %v248, 2147483648
  %v252 = vmul.f32 %v251, 1.442695
  %v253 = vpow.pop %v252
  %v254 = vadd.f32 %v253, 1.0
  %v255 = vrcp.pop %v254
  %v256 = vmul.f32 1.0, %v255
  %v257 = vld [vmem:[%s4] sm:$0x1]
  %v259 = vlaneseq
  %v260 = vshrl.u32 %v259, 7
  %v261 = vsub.s32 0, %v260
  %v262 = vrot.slane %v257, %v261
  %264 = vmatprep.subr.mxu0 0.0
  %265 = vmatpush1.msra.mxu0 %v99
  %266 = vmatprep.subr.mxu0 0.0
  %267 = vmatpush1.msra.mxu0 %v98
  %268 = vmatprep.subr.mxu0 0.0
  %269 = vmatpush1.msra.mxu0 %v97
  %270 = vmatprep.subr.mxu0 0.0
  %271 = vmatpush1.msra.mxu0 %v96
  %272 = vmatprep.subr.mxu0 0.0
  %273 = vmatpush1.msra.mxu0 %v95
  %274 = vmatprep.subr.mxu0 0.0
  %275 = vmatpush1.msra.mxu0 %v94
  %276 = vmatprep.subr.mxu0 0.0
  %277 = vmatpush1.msra.mxu0 %v93
  %278 = vmatprep.subr.mxu0 0.0
  %279 = vmatpush1.msra.mxu0 %v92
  %280 = vmatprep.subr.mxu0 0.0
  %281 = vmatpush1.msra.mxu0 %v91
  %282 = vmatprep.subr.mxu0 0.0
  %283 = vmatpush1.msra.mxu0 %v90
  %284 = vmatprep.subr.mxu0 0.0
  %285 = vmatpush1.msra.mxu0 %v89
  %286 = vmatprep.subr.mxu0 0.0
  %287 = vmatpush1.msra.mxu0 %v88
  %288 = vmatprep.subr.mxu0 0.0
  %289 = vmatpush1.msra.mxu0 %v87
  %290 = vmatprep.subr.mxu0 0.0
  %291 = vmatpush1.msra.mxu0 %v86
  %292 = vmatprep.subr.mxu0 0.0
  %293 = vmatpush1.msra.mxu0 %v85
  %294 = vmatprep.subr.mxu0 0.0
  %295 = vmatpush1.msra.mxu0 %v84
  %296 = vmatprep.subr.mxu0 0.0
  %297 = vmatpush2.msra.mxu0 0.0
  %298 = vmatprep.subr.mxu0 0.0
  %299 = vmatpush2.msra.mxu0 0.0
  %300 = vmatprep.subr.mxu0 0.0
  %301 = vmatpush2.msra.mxu0 0.0
  %302 = vmatprep.subr.mxu0 0.0
  %303 = vmatpush2.msra.mxu0 0.0
  %304 = vmatprep.subr.mxu0 0.0
  %305 = vmatpush2.msra.mxu0 0.0
  %306 = vmatprep.subr.mxu0 0.0
  %307 = vmatpush2.msra.mxu0 0.0
  %308 = vmatprep.subr.mxu0 0.0
  %309 = vmatpush2.msra.mxu0 0.0
  %310 = vmatprep.subr.mxu0 0.0
  %311 = vmatpush2.msra.mxu0 0.0
  %312 = vmatprep.subr.mxu0 0.0
  %313 = vmatpush2.msra.mxu0 0.0
  %314 = vmatprep.subr.mxu0 0.0
  %315 = vmatpush2.msra.mxu0 0.0
  %316 = vmatprep.subr.mxu0 0.0
  %317 = vmatpush2.msra.mxu0 0.0
  %318 = vmatprep.subr.mxu0 0.0
  %319 = vmatpush2.msra.mxu0 0.0
  %320 = vmatprep.subr.mxu0 0.0
  %321 = vmatpush2.msra.mxu0 0.0
  %322 = vmatprep.subr.mxu0 0.0
  %323 = vmatpush2.msra.mxu0 0.0
  %324 = vmatprep.subr.mxu0 0.0
  %325 = vmatpush2.msra.mxu0 0.0
  %326 = vmatprep.subr.mxu0 0.0
  %327 = vmatpush2.msra.mxu0 0.0
  %328 = vmatprep.mubr.f32.mxu0 0.0
  %329 = vmatmul.mubr.f32.gmra.mxu0 %v256
  %v330 = vpop.f32.mrf.mxu0
  %v331 = vadd.f32 %v262, %v330
  %v332 = vpop.f32.mrf.mxu0
  %333 = vdwg.mxu0
  %334 = vst [vmem:[%s5] sm:$0xff] %v331
  // Predicated region
  $region22: #{token_compression.1} parent=0 // pred_check
    _
  $region23: #{token_compression.1} parent=0 // pred_check_branch
    %336 = sbr.rel (0) target = $region25
  $region24: #{token_compression.1} parent=0 // pred_region
    _
  $region25: #{token_compression.1} parent=0 // pred_fallthru
    _
  // Predicated region
  $region26: #{token_compression.1} parent=0 // pred_check
    _
  $region27: #{token_compression.1} parent=0 // pred_check_branch
    %338 = sbr.rel (0) target = $region29
  $region28: #{token_compression.1} parent=0 // pred_region
    _
  $region29: #{token_compression.1} parent=0 // pred_fallthru
    _

</llo_original>
